<compile_context>
chip_gen: v6e
topology: v6e:2x2x1
jax: 0.10.0
libtpu: 0.0.40
codegen_flags: <defaults>
</compile_context>

<pallas_src>
import numpy as np
import jax
import jax.numpy as jnp
from jax.experimental import pallas as pl
from jax.experimental.pallas import tpu as pltpu


# ----------------------------------------------------------------------------
# Constant linear operators (glue, plain numpy, built once offline)
# ----------------------------------------------------------------------------
def adaptive_pool_matrix_T(H, W, s):
    """Pt of shape (H*W, s*s): pooled = x_flat @ Pt == AdaptiveAvgPool2d((s, s))."""
    P = np.zeros((s, s, H, W), dtype=np.float32)
    for i in range(s):
        h0 = (i * H) // s
        h1 = -((-(i + 1) * H) // s)  # ceil((i+1)*H/s)
        for j in range(s):
            w0 = (j * W) // s
            w1 = -((-(j + 1) * W) // s)
            P[i, j, h0:h1, w0:w1] = 1.0 / ((h1 - h0) * (w1 - w0))
    return P.reshape(s * s, H * W).T.copy()


def bilinear_upsample_matrix_T(s, H, W):
    """Ut of shape (s*s, H*W): out = y @ Ut == F.interpolate(..., 'bilinear',
    align_corners=True)."""
    U = np.zeros((H, W, s, s), dtype=np.float32)
    for i in range(H):
        if s == 1:
            h0, h1, fh = 0, 0, 0.0
        else:
            src_h = i * (s - 1) / (H - 1)
            h0 = min(int(np.floor(src_h)), s - 1)
            h1 = min(h0 + 1, s - 1)
            fh = src_h - h0
        for j in range(W):
            if s == 1:
                w0, w1, fw = 0, 0, 0.0
            else:
                src_w = j * (s - 1) / (W - 1)
                w0 = min(int(np.floor(src_w)), s - 1)
                w1 = min(w0 + 1, s - 1)
                fw = src_w - w0
            U[i, j, h0, w0] += (1.0 - fh) * (1.0 - fw)
            U[i, j, h0, w1] += (1.0 - fh) * fw
            U[i, j, h1, w0] += fh * (1.0 - fw)
            U[i, j, h1, w1] += fh * fw
    return U.reshape(H * W, s * s).T.copy()


# ----------------------------------------------------------------------------
# Fused constant operands: all pyramid sizes packed into single matrices
# ----------------------------------------------------------------------------
def build_fused_operands(params, sizes, H, W):
    HW = H * W
    HWp = ((HW + 127) // 128) * 128          # lane-dense output / input last dim
    oc, C = np.asarray(params[0]["W"]).shape
    ss_list = [s * s for s in sizes]
    SS = int(sum(ss_list))
    OC4 = oc * len(sizes)

    Pt_all = np.zeros((HWp, SS), np.float32)   # pool, all sizes column-stacked
    Ut_all = np.zeros((SS, HWp), np.float32)   # upsample, all sizes row-stacked
    Wfold = np.zeros((OC4, C), np.float32)     # conv with BN scale folded in
    shift_b = np.zeros((OC4, SS), np.float32)  # BN shift / bias, pre-broadcast
    mask = np.zeros((OC4, SS), np.float32)     # block-diagonal 0/1 mask

    col = 0
    for idx, (s, p) in enumerate(zip(sizes, params)):
        ss = s * s
        r0 = idx * oc
        Pt_all[:HW, col:col + ss] = adaptive_pool_matrix_T(H, W, s)
        Ut_all[col:col + ss, :HW] = bilinear_upsample_matrix_T(s, H, W)
        Wfold[r0:r0 + oc, :] = np.asarray(p["scale"])[:, None] * np.asarray(p["W"])
        shift_b[r0:r0 + oc, col:col + ss] = np.asarray(p["shift"])[:, None]
        mask[r0:r0 + oc, col:col + ss] = 1.0
        col += ss

    return dict(
        Pt=jnp.asarray(Pt_all, jnp.bfloat16),
        Ut=jnp.asarray(Ut_all, jnp.bfloat16),
        W=jnp.asarray(Wfold, jnp.bfloat16),
        shift=jnp.asarray(shift_b, jnp.float32),
        mask=jnp.asarray(mask, jnp.float32),
        HW=HW, HWp=HWp, OC4=OC4, C=C, SS=SS,
    )


# ----------------------------------------------------------------------------
# Pallas kernel: the whole pyramid + concat for one batch element
# ----------------------------------------------------------------------------
def psp_fused_kernel(x_ref, pt_ref, w_ref, shift_ref, mask_ref, ut_ref, o_ref):
    OC4 = w_ref.shape[0]
    C = x_ref.shape[0]

    x = x_ref[...]                                                  # (C, HWp) bf16
    # adaptive avg-pool for ALL sizes: one matmul, f32 accumulation
    pooled = jnp.dot(x, pt_ref[...],
                     preferred_element_type=jnp.float32)            # (C, SS)
    # 1x1 conv for ALL sizes (BN scale pre-folded into W)
    z = jnp.dot(w_ref[...], pooled.astype(w_ref.dtype),
                preferred_element_type=jnp.float32)                 # (OC4, SS)
    # shift + ReLU, then zero cross-size blocks AFTER relu so relu(shift) does
    # not leak into other sizes' upsample
    y = jnp.maximum(z + shift_ref[...], 0.0) * mask_ref[...]        # (OC4, SS)
    # bilinear upsample for ALL sizes: one matmul
    psp = jnp.dot(y.astype(ut_ref.dtype), ut_ref[...],
                  preferred_element_type=jnp.float32)               # (OC4, HWp)

    # write the concatenated result directly (no separate concat pass)
    o_ref[pl.ds(0, OC4), :] = psp.astype(o_ref.dtype)
    o_ref[pl.ds(OC4, C), :] = x.astype(o_ref.dtype)


def psp_module_forward(x, fused):
    """x: (N, C, H, W) f32 -> (N, C + 4*oc, H, W) f32 (PSP outputs then x)."""
    N, C, H, W = x.shape
    HW, HWp = fused["HW"], fused["HWp"]
    OC4, SS = fused["OC4"], fused["SS"]
    C_out = OC4 + C

    x_flat = x.reshape(N, C, HW)
    if HWp != HW:
        x_flat = jnp.pad(x_flat, ((0, 0), (0, 0), (0, HWp - HW)))
    x_bf = x_flat.astype(jnp.bfloat16)

    # VMEM budget: double-buffered x/out blocks + (double-buffered) constants.
    # NOTE: constants could use pipeline_mode=pl.Buffered(1) / a VMEM scratch
    # load-once to save one buffer each once Pt/Ut get large.
    est = (2 * C * HWp * 2 + 2 * C_out * HWp * 4
           + 2 * (2 * HWp * SS * 2 + OC4 * C * 2 + 2 * OC4 * SS * 4))
    vmem_limit = int(min(100 * 1024 * 1024, est + (32 << 20)))

    out = pl.pallas_call(
        psp_fused_kernel,
        out_shape=jax.ShapeDtypeStruct((N, C_out, HWp), jnp.float32),
        grid=(N,),
        in_specs=[
            pl.BlockSpec((None, C, HWp), lambda n: (n, 0, 0)),  # x (read once)
            pl.BlockSpec((HWp, SS), lambda n: (0, 0)),          # Pt_all
            pl.BlockSpec((OC4, C), lambda n: (0, 0)),           # W folded
            pl.BlockSpec((OC4, SS), lambda n: (0, 0)),          # shift (bcast)
            pl.BlockSpec((OC4, SS), lambda n: (0, 0)),          # block mask
            pl.BlockSpec((SS, HWp), lambda n: (0, 0)),          # Ut_all
        ],
        out_specs=pl.BlockSpec((None, C_out, HWp), lambda n: (n, 0, 0)),
        compiler_params=pltpu.CompilerParams(
            dimension_semantics=("parallel",),
            vmem_limit_bytes=vmem_limit),
    )(x_bf, fused["Pt"], fused["W"], fused["shift"], fused["mask"], fused["Ut"])

    return out[:, :, :HW].reshape(N, C_out, H, W)


# ----------------------------------------------------------------------------
# Pure-JAX f32 reference (per-size, unfused) and parameter init
# ----------------------------------------------------------------------------
def psp_module_reference(x, params, sizes):
    N, C, H, W = x.shape
    x_flat = x.reshape(N, C, H * W)
    outs = []
    for s, p in zip(sizes, params):
        Pt = jnp.asarray(adaptive_pool_matrix_T(H, W, s))
        Ut = jnp.asarray(bilinear_upsample_matrix_T(s, H, W))
        pooled = jnp.einsum('ncp,ps->ncs', x_flat, Pt)
        y = jnp.einsum('oc,ncs->nos', p["W"], pooled)
        y = y * p["scale"][None, :, None] + p["shift"][None, :, None]
        y = jnp.maximum(y, 0.0)
        o = jnp.einsum('nos,sp->nop', y, Ut)
        outs.append(o.reshape(N, -1, H, W))
    outs.append(x)
    return jnp.concatenate(outs, axis=1)


def init_params(key, in_channels, sizes):
    out_c = in_channels // len(sizes)
    eps = 1e-5
    params = []
    for s in sizes:
        key, k_w, k_b, k_g, k_be, k_m, k_v = jax.random.split(key, 7)
        Wconv = 0.1 * jax.random.normal(k_w, (out_c, in_channels), dtype=jnp.float32)
        if s == 1:
            # pool_size == 1 -> use_batchnorm forced off -> conv has a bias
            bias = 0.1 * jax.random.normal(k_b, (out_c,), dtype=jnp.float32)
            scale = jnp.ones((out_c,), dtype=jnp.float32)
            shift = bias
        else:
            gamma = 1.0 + 0.1 * jax.random.normal(k_g, (out_c,), dtype=jnp.float32)
            beta = 0.1 * jax.random.normal(k_be, (out_c,), dtype=jnp.float32)
            mean = 0.1 * jax.random.normal(k_m, (out_c,), dtype=jnp.float32)
            var = 0.5 + jnp.abs(jax.random.normal(k_v, (out_c,), dtype=jnp.float32))
            scale = gamma / jnp.sqrt(var + eps)
            shift = beta - mean * scale
        params.append({"W": Wconv, "scale": scale, "shift": shift})
    return params


if __name__ == "__main__":
    N, C, H, W = 2, 8, 16, 16
    sizes = (1, 2, 3, 6)

    key = jax.random.PRNGKey(0)
    key, kx = jax.random.split(key)
    x = jax.random.normal(kx, (N, C, H, W), dtype=jnp.float32)

    params = init_params(key, C, sizes)
    fused = build_fused_operands(params, sizes, H, W)

    out = psp_module_forward(x, fused)
    out = jax.block_until_ready(out)

    ref = psp_module_reference(x, params, sizes)
    expected_channels = C + len(sizes) * (C // len(sizes))
    assert out.shape == (N, expected_channels, H, W), out.shape
    # bf16 matmul operands (f32 accumulation) vs. pure f32 reference
    np.testing.assert_allclose(np.asarray(out), np.asarray(ref),
                               rtol=2e-2, atol=2e-2)

    print("KERNEL_OK")
</pallas_src>

<mosaic_0001>
module attributes {stable_mosaic.version = 11 : i64} {
  func.func @psp_fused_kernel(%arg0: i32, %arg1: memref<1x8x256xbf16, #tpu.memory_space<vmem>>, %arg2: memref<256x50xbf16, #tpu.memory_space<vmem>>, %arg3: memref<8x8xbf16, #tpu.memory_space<vmem>>, %arg4: memref<8x50xf32, #tpu.memory_space<vmem>>, %arg5: memref<8x50xf32, #tpu.memory_space<vmem>>, %arg6: memref<50x256xbf16, #tpu.memory_space<vmem>>, %arg7: memref<1x16x256xf32, #tpu.memory_space<vmem>>) attributes {dimension_semantics = [#tpu.dimension_semantics<parallel>], iteration_bounds = array<i64: 2>, scalar_prefetch = 0 : i64, scratch_operands = 0 : i64, tpu.core_type = #tpu.core_type<tc>, window_params = [{transform_indices = @transform_0, window_bounds = array<i64: 1, 8, 256>}, {pipeline_mode = #tpu.pipeline_mode<synchronous>, transform_indices = @transform_1, window_bounds = array<i64: 256, 50>}, {pipeline_mode = #tpu.pipeline_mode<synchronous>, transform_indices = @transform_2, window_bounds = array<i64: 8, 8>}, {pipeline_mode = #tpu.pipeline_mode<synchronous>, transform_indices = @transform_3, window_bounds = array<i64: 8, 50>}, {pipeline_mode = #tpu.pipeline_mode<synchronous>, transform_indices = @transform_4, window_bounds = array<i64: 8, 50>}, {pipeline_mode = #tpu.pipeline_mode<synchronous>, transform_indices = @transform_5, window_bounds = array<i64: 50, 256>}, {transform_indices = @transform_6, window_bounds = array<i64: 1, 16, 256>}]} {
    %c0 = arith.constant 0 : index
    %c0_0 = arith.constant 0 : index
    %c0_1 = arith.constant 0 : index
    %0 = vector.load %arg1[%c0, %c0_0, %c0_1] : memref<1x8x256xbf16, #tpu.memory_space<vmem>>, vector<1x8x256xbf16>
    %1 = vector.shape_cast %0 : vector<1x8x256xbf16> to vector<8x256xbf16>
    %c0_2 = arith.constant 0 : index
    %c0_3 = arith.constant 0 : index
    %2 = vector.load %arg2[%c0_2, %c0_3] : memref<256x50xbf16, #tpu.memory_space<vmem>>, vector<256x50xbf16>
    %cst = arith.constant dense<0.000000e+00> : vector<8x50xf32>
    %3 = tpu.matmul %1, %2, %cst {dimension_numbers = #tpu.dot_dimension_numbers<[1], [0], [0], [1], [0, 0, 1, 1], [], []>} : vector<8x256xbf16>, vector<256x50xbf16>, vector<8x50xf32> -> vector<8x50xf32>
    %c0_4 = arith.constant 0 : index
    %c0_5 = arith.constant 0 : index
    %4 = vector.load %arg3[%c0_4, %c0_5] : memref<8x8xbf16, #tpu.memory_space<vmem>>, vector<8x8xbf16>
    %5 = arith.truncf %3 : vector<8x50xf32> to vector<8x50xbf16>
    %cst_6 = arith.constant dense<0.000000e+00> : vector<8x50xf32>
    %6 = tpu.matmul %4, %5, %cst_6 {dimension_numbers = #tpu.dot_dimension_numbers<[1], [0], [0], [1], [0, 0, 1, 1], [], []>} : vector<8x8xbf16>, vector<8x50xbf16>, vector<8x50xf32> -> vector<8x50xf32>
    %c0_7 = arith.constant 0 : index
    %c0_8 = arith.constant 0 : index
    %7 = vector.load %arg4[%c0_7, %c0_8] : memref<8x50xf32, #tpu.memory_space<vmem>>, vector<8x50xf32>
    %8 = arith.addf %6, %7 : vector<8x50xf32>
    %cst_9 = arith.constant 0.000000e+00 : f32
    %9 = vector.broadcast %cst_9 : f32 to vector<8x50xf32>
    %10 = arith.maximumf %8, %9 : vector<8x50xf32>
    %c0_10 = arith.constant 0 : index
    %c0_11 = arith.constant 0 : index
    %11 = vector.load %arg5[%c0_10, %c0_11] : memref<8x50xf32, #tpu.memory_space<vmem>>, vector<8x50xf32>
    %12 = arith.mulf %10, %11 : vector<8x50xf32>
    %13 = arith.truncf %12 : vector<8x50xf32> to vector<8x50xbf16>
    %c0_12 = arith.constant 0 : index
    %c0_13 = arith.constant 0 : index
    %14 = vector.load %arg6[%c0_12, %c0_13] : memref<50x256xbf16, #tpu.memory_space<vmem>>, vector<50x256xbf16>
    %cst_14 = arith.constant dense<0.000000e+00> : vector<8x256xf32>
    %15 = tpu.matmul %13, %14, %cst_14 {dimension_numbers = #tpu.dot_dimension_numbers<[1], [0], [0], [1], [0, 0, 1, 1], [], []>} : vector<8x50xbf16>, vector<50x256xbf16>, vector<8x256xf32> -> vector<8x256xf32>
    %c0_15 = arith.constant 0 : index
    %c0_16 = arith.constant 0 : index
    %c0_17 = arith.constant 0 : index
    %16 = vector.load %arg7[%c0_15, %c0_16, %c0_17] : memref<1x16x256xf32, #tpu.memory_space<vmem>>, vector<1x8x256xf32>
    %17 = vector.shape_cast %16 : vector<1x8x256xf32> to vector<8x256xf32>
    %18 = vector.shape_cast %15 : vector<8x256xf32> to vector<1x8x256xf32>
    tpu.vector_store %arg7[%c0_15, %c0_16, %c0_17], %18 {strides = array<i32>} : memref<1x16x256xf32, #tpu.memory_space<vmem>>, vector<1x8x256xf32>,
    %19 = arith.extf %1 : vector<8x256xbf16> to vector<8x256xf32>
    %c0_18 = arith.constant 0 : index
    %c8 = arith.constant 8 : index
    %c0_19 = arith.constant 0 : index
    %20 = vector.load %arg7[%c0_18, %c8, %c0_19] : memref<1x16x256xf32, #tpu.memory_space<vmem>>, vector<1x8x256xf32>
    %21 = vector.shape_cast %20 : vector<1x8x256xf32> to vector<8x256xf32>
    %22 = vector.shape_cast %19 : vector<8x256xf32> to vector<1x8x256xf32>
    tpu.vector_store %arg7[%c0_18, %c8, %c0_19], %22 {strides = array<i32>} : memref<1x16x256xf32, #tpu.memory_space<vmem>>, vector<1x8x256xf32>,
    return
  }
  func.func @transform_0(%arg0: i32) -> (i32, i32, i32) {
    %c0_i32 = arith.constant 0 : i32
    %c0_i32_0 = arith.constant 0 : i32
    %c0_i32_1 = arith.constant 0 : i32
    return %arg0, %c0_i32, %c0_i32_0 : i32, i32, i32
  }
  func.func @transform_1(%arg0: i32) -> (i32, i32) {
    %c0_i32 = arith.constant 0 : i32
    %c0_i32_0 = arith.constant 0 : i32
    %c0_i32_1 = arith.constant 0 : i32
    return %c0_i32, %c0_i32_0 : i32, i32
  }
  func.func @transform_2(%arg0: i32) -> (i32, i32) {
    %c0_i32 = arith.constant 0 : i32
    %c0_i32_0 = arith.constant 0 : i32
    %c0_i32_1 = arith.constant 0 : i32
    return %c0_i32, %c0_i32_0 : i32, i32
  }
  func.func @transform_3(%arg0: i32) -> (i32, i32) {
    %c0_i32 = arith.constant 0 : i32
    %c0_i32_0 = arith.constant 0 : i32
    %c0_i32_1 = arith.constant 0 : i32
    return %c0_i32, %c0_i32_0 : i32, i32
  }
  func.func @transform_4(%arg0: i32) -> (i32, i32) {
    %c0_i32 = arith.constant 0 : i32
    %c0_i32_0 = arith.constant 0 : i32
    %c0_i32_1 = arith.constant 0 : i32
    return %c0_i32, %c0_i32_0 : i32, i32
  }
  func.func @transform_5(%arg0: i32) -> (i32, i32) {
    %c0_i32 = arith.constant 0 : i32
    %c0_i32_0 = arith.constant 0 : i32
    %c0_i32_1 = arith.constant 0 : i32
    return %c0_i32, %c0_i32_0 : i32, i32
  }
  func.func @transform_6(%arg0: i32) -> (i32, i32, i32) {
    %c0_i32 = arith.constant 0 : i32
    %c0_i32_0 = arith.constant 0 : i32
    %c0_i32_1 = arith.constant 0 : i32
    return %arg0, %c0_i32, %c0_i32_0 : i32, i32, i32
  }
}

</mosaic_0001>

<llo_original>
// kernel: tpu_custom_call.1
$region0: #{tpu_custom_call.1}
  #allocation0 [shape = 'u32[]', space=smem, size = 0x4, offset = 0x4, fixed_abs, tag = 'smem constant byte address 0x4 - core index']
  #allocation1 [shape = 'u32[144,128]{1,0:T(1,128)}', space=vmem, size = 0x12000, scoped, tag = 'internal scratch']
  %s0 = inlined_call_operand.vmem [shape: bf16[2,8,256], index: 0, kind: input, shape index: {}]
  %s1 = inlined_call_operand.vmem [shape: bf16[256,50], index: 1, kind: input, shape index: {}]
  %s2 = inlined_call_operand.vmem [shape: bf16[8,8], index: 2, kind: input, shape index: {}]
  %s3 = inlined_call_operand.vmem [shape: f32[8,50], index: 3, kind: input, shape index: {}]
  %s4 = inlined_call_operand.vmem [shape: f32[8,50], index: 4, kind: input, shape index: {}]
  %s5 = inlined_call_operand.vmem [shape: bf16[50,256], index: 5, kind: input, shape index: {}]
  %s6 = inlined_call_operand.hbm [shape: f32[2,16,256], index: 6, kind: output, shape index: {}]
  %s7 = sld [smem:[#allocation0]]
  $region57: #{tpu_custom_call.1} parent=0
    _
  %s9 = ssub.s32 1, %s7
  %s10 = scalar_select 0, %s9, %s7
  $region1: #{tpu_custom_call.1} parent=0
    #allocation2 [shape = 'u8[32768]{0}', space=vmem, size = 0x8000, scoped, tag = 'output window, operand 0']
    #allocation3 [shape = 's32[2]{0}', space=sflag, size = 0x8, scoped, tag = 'scoped memory for tpu_custom_call.1']
    %11 = vsyncpa [#allocation3], 0
    %s12 = scalar_lea.sflag [#allocation3], 1
    %13 = vsyncpa %s12, 0
    loop: start=0, step=1, limit=4
    $region2: #{tpu_custom_call.1} parent=1 // loop_pre_header
      _
    $region3: #{tpu_custom_call.1} parent=1 // loop_header
      %s15 = sphi 0, %s19
      %p16 = scmp.ge.s32.totalorder %s15, 4
      %s25 = sphi 0, %s27
      %s28 = sphi 0, %s25
      %s29 = sphi 0, %s28
      %s45 = sphi 0, %s29
      %s49 = sphi 0, %s49
      %s51 = sphi 0, %s49
      %s52 = sphi 0, %s51
      %s66 = sphi 0, %s52
      %s70 = sphi 0, %s70
      %s72 = sphi 0, %s70
      %s73 = sphi 0, %s72
      %s87 = sphi 0, %s73
      %s91 = sphi 0, %s91
      %s93 = sphi 0, %s91
      %s94 = sphi 0, %s93
      %s108 = sphi 0, %s94
      %s112 = sphi 0, %s112
      %s114 = sphi 0, %s112
      %s115 = sphi 0, %s114
      %s129 = sphi 0, %s115
      %s133 = sphi 0, %s133
      %s135 = sphi 0, %s133
      %s136 = sphi 0, %s135
      %s150 = sphi 0, %s136
      %s156 = sphi 0, %s158
      %s159 = sphi 0, %s156
      %s160 = sphi 0, %s159
      %s176 = sphi 0, %s160
    $region4: #{tpu_custom_call.1} parent=1 // loop_header_branch
      %18 = sbr.rel (%p16) target = $region8
    $region5: #{tpu_custom_call.1} parent=1 // loop_body
      %s20 = ssub.s32 %s15, 1
      %s21 = ssub.s32 %s15, 2
      %s22 = sadd.s32 %s15, 1
      %s23 = ssub.s32 %s15, %s22
      %p24 = scmp.eq.s32.totalorder %s23, 0
      %s26 = sadd.s32 %s25, 1
      %s27 = scalar_select %p24, %s25, %s26
      %p30 = pneg %p24
      %p31 = scmp.eq.s32.totalorder %s15, 1
      %p32 = por %p30, %p31
      %p33 = scmp.ne.s32.totalorder %s25, %s28
      %p34 = scmp.eq.s32.totalorder %s15, 0
      %p35 = por %p33, %p34
      %p36 = scmp.ne.s32.totalorder %s25, %s28
      %p37 = scmp.eq.s32.totalorder %s20, 1
      %p38 = por %p36, %p37
      %p39 = scmp.ne.s32.totalorder %s28, %s29
      %p40 = scmp.eq.s32.totalorder %s20, 0
      %p41 = por %p39, %p40
      %p42 = scmp.ne.s32.totalorder %s28, %s29
      %p43 = scmp.eq.s32.totalorder %s21, 1
      %p44 = por %p42, %p43
      %p46 = scmp.ne.s32.totalorder %s29, %s45
      %p47 = scmp.eq.s32.totalorder %s21, 0
      %p48 = por %p46, %p47
      %s50 = sadd.s32 %s49, 1
      %p53 = scmp.eq.s32.totalorder %s15, 1
      %p54 = scmp.ne.s32.totalorder %s49, %s51
      %p55 = scmp.eq.s32.totalorder %s15, 0
      %p56 = por %p54, %p55
      %p57 = scmp.ne.s32.totalorder %s49, %s51
      %p58 = scmp.eq.s32.totalorder %s20, 1
      %p59 = por %p57, %p58
      %p60 = scmp.ne.s32.totalorder %s51, %s52
      %p61 = scmp.eq.s32.totalorder %s20, 0
      %p62 = por %p60, %p61
      %p63 = scmp.ne.s32.totalorder %s51, %s52
      %p64 = scmp.eq.s32.totalorder %s21, 1
      %p65 = por %p63, %p64
      %p67 = scmp.ne.s32.totalorder %s52, %s66
      %p68 = scmp.eq.s32.totalorder %s21, 0
      %p69 = por %p67, %p68
      %s71 = sadd.s32 %s70, 1
      %p74 = scmp.eq.s32.totalorder %s15, 1
      %p75 = scmp.ne.s32.totalorder %s70, %s72
      %p76 = scmp.eq.s32.totalorder %s15, 0
      %p77 = por %p75, %p76
      %p78 = scmp.ne.s32.totalorder %s70, %s72
      %p79 = scmp.eq.s32.totalorder %s20, 1
      %p80 = por %p78, %p79
      %p81 = scmp.ne.s32.totalorder %s72, %s73
      %p82 = scmp.eq.s32.totalorder %s20, 0
      %p83 = por %p81, %p82
      %p84 = scmp.ne.s32.totalorder %s72, %s73
      %p85 = scmp.eq.s32.totalorder %s21, 1
      %p86 = por %p84, %p85
      %p88 = scmp.ne.s32.totalorder %s73, %s87
      %p89 = scmp.eq.s32.totalorder %s21, 0
      %p90 = por %p88, %p89
      %s92 = sadd.s32 %s91, 1
      %p95 = scmp.eq.s32.totalorder %s15, 1
      %p96 = scmp.ne.s32.totalorder %s91, %s93
      %p97 = scmp.eq.s32.totalorder %s15, 0
      %p98 = por %p96, %p97
      %p99 = scmp.ne.s32.totalorder %s91, %s93
      %p100 = scmp.eq.s32.totalorder %s20, 1
      %p101 = por %p99, %p100
      %p102 = scmp.ne.s32.totalorder %s93, %s94
      %p103 = scmp.eq.s32.totalorder %s20, 0
      %p104 = por %p102, %p103
      %p105 = scmp.ne.s32.totalorder %s93, %s94
      %p106 = scmp.eq.s32.totalorder %s21, 1
      %p107 = por %p105, %p106
      %p109 = scmp.ne.s32.totalorder %s94, %s108
      %p110 = scmp.eq.s32.totalorder %s21, 0
      %p111 = por %p109, %p110
      %s113 = sadd.s32 %s112, 1
      %p116 = scmp.eq.s32.totalorder %s15, 1
      %p117 = scmp.ne.s32.totalorder %s112, %s114
      %p118 = scmp.eq.s32.totalorder %s15, 0
      %p119 = por %p117, %p118
      %p120 = scmp.ne.s32.totalorder %s112, %s114
      %p121 = scmp.eq.s32.totalorder %s20, 1
      %p122 = por %p120, %p121
      %p123 = scmp.ne.s32.totalorder %s114, %s115
      %p124 = scmp.eq.s32.totalorder %s20, 0
      %p125 = por %p123, %p124
      %p126 = scmp.ne.s32.totalorder %s114, %s115
      %p127 = scmp.eq.s32.totalorder %s21, 1
      %p128 = por %p126, %p127
      %p130 = scmp.ne.s32.totalorder %s115, %s129
      %p131 = scmp.eq.s32.totalorder %s21, 0
      %p132 = por %p130, %p131
      %s134 = sadd.s32 %s133, 1
      %p137 = scmp.eq.s32.totalorder %s15, 1
      %p138 = scmp.ne.s32.totalorder %s133, %s135
      %p139 = scmp.eq.s32.totalorder %s15, 0
      %p140 = por %p138, %p139
      %p141 = scmp.ne.s32.totalorder %s133, %s135
      %p142 = scmp.eq.s32.totalorder %s20, 1
      %p143 = por %p141, %p142
      %p144 = scmp.ne.s32.totalorder %s135, %s136
      %p145 = scmp.eq.s32.totalorder %s20, 0
      %p146 = por %p144, %p145
      %p147 = scmp.ne.s32.totalorder %s135, %s136
      %p148 = scmp.eq.s32.totalorder %s21, 1
      %p149 = por %p147, %p148
      %p151 = scmp.ne.s32.totalorder %s136, %s150
      %p152 = scmp.eq.s32.totalorder %s21, 0
      %p153 = por %p151, %p152
      %s154 = ssub.s32 %s15, %s22
      %p155 = scmp.eq.s32.totalorder %s154, 0
      %s157 = sadd.s32 %s156, 1
      %s158 = scalar_select %p155, %s156, %s157
      %p161 = pneg %p155
      %p162 = scmp.eq.s32.totalorder %s15, 1
      %p163 = por %p161, %p162
      %p164 = scmp.ne.s32.totalorder %s156, %s159
      %p165 = scmp.eq.s32.totalorder %s15, 0
      %p166 = por %p164, %p165
      %p167 = scmp.ne.s32.totalorder %s156, %s159
      %p168 = scmp.eq.s32.totalorder %s20, 1
      %p169 = por %p167, %p168
      %p170 = scmp.ne.s32.totalorder %s159, %s160
      %p171 = scmp.eq.s32.totalorder %s20, 0
      %p172 = por %p170, %p171
      %p173 = scmp.ne.s32.totalorder %s159, %s160
      %p174 = scmp.eq.s32.totalorder %s21, 1
      %p175 = por %p173, %p174
      %p177 = scmp.ne.s32.totalorder %s160, %s176
      %p178 = scmp.eq.s32.totalorder %s21, 0
      %p179 = por %p177, %p178
      %p180 = scmp.le.s32.totalorder 1, %s15
      %p181 = scmp.lt.s32.totalorder %s15, 3
      %p182 = pnand %p180, %p181
      %p183 = pneg %p182
      // Predicated region
      $region9: #{tpu_custom_call.1} parent=5 // pred_check
        _
      $region10: #{tpu_custom_call.1} parent=5 // pred_check_branch
        %185 = sbr.rel (%p182) target = $region12
      $region11: #{tpu_custom_call.1} parent=5 // pred_region
        %s186 = ssub.s32 %s15, 1
        // Predicated region
        $region13: #{tpu_custom_call.1} parent=11 // pred_check
          %p187 = pneg %p62
        $region14: #{tpu_custom_call.1} parent=11 // pred_check_branch
          %189 = sbr.rel (%p187) target = $region16
        $region15: #{tpu_custom_call.1} parent=11 // pred_region
          _
        $region16: #{tpu_custom_call.1} parent=11 // pred_fallthru
          _
        // Predicated region
        $region17: #{tpu_custom_call.1} parent=11 // pred_check
          %p190 = pneg %p83
        $region18: #{tpu_custom_call.1} parent=11 // pred_check_branch
          %192 = sbr.rel (%p190) target = $region20
        $region19: #{tpu_custom_call.1} parent=11 // pred_region
          _
        $region20: #{tpu_custom_call.1} parent=11 // pred_fallthru
          _
        // Predicated region
        $region21: #{tpu_custom_call.1} parent=11 // pred_check
          %p193 = pneg %p104
        $region22: #{tpu_custom_call.1} parent=11 // pred_check_branch
          %195 = sbr.rel (%p193) target = $region24
        $region23: #{tpu_custom_call.1} parent=11 // pred_region
          _
        $region24: #{tpu_custom_call.1} parent=11 // pred_fallthru
          _
        // Predicated region
        $region25: #{tpu_custom_call.1} parent=11 // pred_check
          %p196 = pneg %p125
        $region26: #{tpu_custom_call.1} parent=11 // pred_check_branch
          %198 = sbr.rel (%p196) target = $region28
        $region27: #{tpu_custom_call.1} parent=11 // pred_region
          _
        $region28: #{tpu_custom_call.1} parent=11 // pred_fallthru
          _
        // Predicated region
        $region29: #{tpu_custom_call.1} parent=11 // pred_check
          %p199 = pneg %p146
        $region30: #{tpu_custom_call.1} parent=11 // pred_check_branch
          %201 = sbr.rel (%p199) target = $region32
        $region31: #{tpu_custom_call.1} parent=11 // pred_region
          _
        $region32: #{tpu_custom_call.1} parent=11 // pred_fallthru
          _
      $region12: #{tpu_custom_call.1} parent=5 // pred_fallthru
        _
      %p202 = scmp.lt.s32.totalorder %s15, 2
      // Predicated region
      $region33: #{tpu_custom_call.1} parent=5 // pred_check
        %p203 = pneg %p202
      $region34: #{tpu_custom_call.1} parent=5 // pred_check_branch
        %205 = sbr.rel (%p203) target = $region36
      $region35: #{tpu_custom_call.1} parent=5 // pred_region
        // Predicated region
        $region37: #{tpu_custom_call.1} parent=35 // pred_check
          %p206 = pneg %p35
        $region38: #{tpu_custom_call.1} parent=35 // pred_check_branch
          %208 = sbr.rel (%p206) target = $region40
        $region39: #{tpu_custom_call.1} parent=35 // pred_region
          %p209 = scmp.lt.s32.totalorder %s15, 1
          %s210 = scalar_select %p209, %s15, 1
          %s211 = smul.addr %s210, 2
          %s212 = smul.addr %s211, 4
          %s213 = scalar_lea.vmem %s0, %s212
        $region40: #{tpu_custom_call.1} parent=35 // pred_fallthru
          _
      $region36: #{tpu_custom_call.1} parent=5 // pred_fallthru
        _
      %p214 = scmp.le.s32.totalorder 1, %s15
      %p215 = scmp.lt.s32.totalorder %s15, 3
      %p216 = pnand %p214, %p215
      %p217 = pneg %p216
      // Predicated region
      $region41: #{tpu_custom_call.1} parent=5 // pred_check
        _
      $region42: #{tpu_custom_call.1} parent=5 // pred_check_branch
        %219 = sbr.rel (%p216) target = $region44
      $region43: #{tpu_custom_call.1} parent=5 // pred_region
        %s220 = ssub.s32 %s15, 1
        %p221 = scmp.lt.s32.totalorder %s20, 1
        %s222 = scalar_select %p221, %s20, 1
        %s223 = smul.addr %s222, 2
        %s224 = smul.addr %s223, 4
        %s225 = scalar_lea.vmem %s0, %s224
        %p226 = pneg %p41
        %p227 = pneg %p38
        %p228 = pneg %p62
        %p229 = pneg %p59
        %p230 = pneg %p83
        %p231 = pneg %p80
        %p232 = pneg %p104
        %p233 = pneg %p101
        %p234 = pneg %p125
        %p235 = pneg %p122
        %p236 = pneg %p146
        %p237 = pneg %p143
        %p238 = pneg %p172
        %p239 = pneg %p169
        %s240 = sand.u32 %s159, 1
        %s241 = scalar_lea.sflag [#allocation3], %s240
        %s242 = sand.u32 %s159, 1
        %s243 = smul.addr %s242, 32
        %s244 = scalar_lea.vmem [#allocation2], %s243
        %p245 = scmp.lt.s32.totalorder %s20, 1
        %s246 = scalar_select %p245, %s20, 1
        %s247 = smul.addr %s246, 2
        %s248 = smul.addr %s247, 4
        %s249 = scalar_lea.vmem %s0, %s248
        %v251 = vld [vmem:[%s249] sm:$0xff]
        %v252 = vld [vmem:[%s1] sm:$0xf]
        %v253 = vld [vmem:[%s1 + $0x4] sm:$0xf]
        %v254 = vld [vmem:[%s1 + $0x8] sm:$0xf]
        %v255 = vld [vmem:[%s1 + $0xc] sm:$0xf]
        %v256 = vld [vmem:[%s1 + $0x10] sm:$0xf]
        %v257 = vld [vmem:[%s1 + $0x14] sm:$0xf]
        %v258 = vld [vmem:[%s1 + $0x18] sm:$0xf]
        %v259 = vld [vmem:[%s1 + $0x1c] sm:$0xf]
        %v260 = vld [vmem:[%s1 + $0x20] sm:$0xf]
        %v261 = vld [vmem:[%s1 + $0x24] sm:$0xf]
        %v262 = vld [vmem:[%s1 + $0x28] sm:$0xf]
        %v263 = vld [vmem:[%s1 + $0x2c] sm:$0xf]
        %v264 = vld [vmem:[%s1 + $0x30] sm:$0xf]
        %v265 = vld [vmem:[%s1 + $0x34] sm:$0xf]
        %v266 = vld [vmem:[%s1 + $0x38] sm:$0xf]
        %v267 = vld [vmem:[%s1 + $0x3c] sm:$0xf]
        %v268 = vld [vmem:[%s1 + $0x40] sm:$0xf]
        %v269 = vld [vmem:[%s1 + $0x44] sm:$0xf]
        %v270 = vld [vmem:[%s1 + $0x48] sm:$0xf]
        %v271 = vld [vmem:[%s1 + $0x4c] sm:$0xf]
        %v272 = vld [vmem:[%s1 + $0x50] sm:$0xf]
        %v273 = vld [vmem:[%s1 + $0x54] sm:$0xf]
        %v274 = vld [vmem:[%s1 + $0x58] sm:$0xf]
        %v275 = vld [vmem:[%s1 + $0x5c] sm:$0xf]
        %v276 = vld [vmem:[%s1 + $0x60] sm:$0xf]
        %v277 = vld [vmem:[%s1 + $0x64] sm:$0xf]
        %v278 = vld [vmem:[%s1 + $0x68] sm:$0xf]
        %v279 = vld [vmem:[%s1 + $0x6c] sm:$0xf]
        %v280 = vld [vmem:[%s1 + $0x70] sm:$0xf]
        %v281 = vld [vmem:[%s1 + $0x74] sm:$0xf]
        %v282 = vld [vmem:[%s1 + $0x78] sm:$0xf]
        %v283 = vld [vmem:[%s1 + $0x7c] sm:$0xf]
        %v285 = vunpack.c.l.b16 %v251
        %v286 = vunpack.c.h.b16 %v251
        %v287 = vpack.c.b16 %v285, %v285
        %v288 = vpack.c.b16 %v286, %v286
        %v323 = vunpack.c.l.b16 %v252
        %v324 = vunpack.c.l.b16 %v253
        %v325 = vunpack.c.l.b16 %v254
        %v326 = vunpack.c.l.b16 %v255
        %v327 = vunpack.c.l.b16 %v256
        %v328 = vunpack.c.l.b16 %v257
        %v329 = vunpack.c.l.b16 %v258
        %v330 = vunpack.c.l.b16 %v259
        %v331 = vunpack.c.l.b16 %v260
        %v332 = vunpack.c.l.b16 %v261
        %v333 = vunpack.c.l.b16 %v262
        %v334 = vunpack.c.l.b16 %v263
        %v335 = vunpack.c.l.b16 %v264
        %v336 = vunpack.c.l.b16 %v265
        %v337 = vunpack.c.l.b16 %v266
        %v338 = vunpack.c.l.b16 %v267
        %v339 = vunpack.c.l.b16 %v268
        %v340 = vunpack.c.l.b16 %v269
        %v341 = vunpack.c.l.b16 %v270
        %v342 = vunpack.c.l.b16 %v271
        %v343 = vunpack.c.l.b16 %v272
        %v344 = vunpack.c.l.b16 %v273
        %v345 = vunpack.c.l.b16 %v274
        %v346 = vunpack.c.l.b16 %v275
        %v347 = vunpack.c.l.b16 %v276
        %v348 = vunpack.c.l.b16 %v277
        %v349 = vunpack.c.l.b16 %v278
        %v350 = vunpack.c.l.b16 %v279
        %v351 = vunpack.c.l.b16 %v280
        %v352 = vunpack.c.l.b16 %v281
        %v353 = vunpack.c.l.b16 %v282
        %v354 = vunpack.c.l.b16 %v283
        %v355 = vpack.c.b16 %v324, %v323
        %v356 = vpack.c.b16 %v326, %v325
        %v357 = vpack.c.b16 %v328, %v327
        %v358 = vpack.c.b16 %v330, %v329
        %v359 = vpack.c.b16 %v332, %v331
        %v360 = vpack.c.b16 %v334, %v333
        %v361 = vpack.c.b16 %v336, %v335
        %v362 = vpack.c.b16 %v338, %v337
        %v363 = vpack.c.b16 %v340, %v339
        %v364 = vpack.c.b16 %v342, %v341
        %v365 = vpack.c.b16 %v344, %v343
        %v366 = vpack.c.b16 %v346, %v345
        %v367 = vpack.c.b16 %v348, %v347
        %v368 = vpack.c.b16 %v350, %v349
        %v369 = vpack.c.b16 %v352, %v351
        %v370 = vpack.c.b16 %v354, %v353
        %387 = vmatprep.subr.bf16.mxu0 0
        %388 = vmatpush1.bf16.msra.mxu0 %v362
        %389 = vmatprep.subr.bf16.mxu0 0
        %390 = vmatpush1.bf16.msra.mxu0 %v361
        %391 = vmatprep.subr.bf16.mxu0 0
        %392 = vmatpush1.bf16.msra.mxu0 %v360
        %393 = vmatprep.subr.bf16.mxu0 0
        %394 = vmatpush1.bf16.msra.mxu0 %v359
        %395 = vmatprep.subr.bf16.mxu0 0
        %396 = vmatpush1.bf16.msra.mxu0 %v358
        %397 = vmatprep.subr.bf16.mxu0 0
        %398 = vmatpush1.bf16.msra.mxu0 %v357
        %399 = vmatprep.subr.bf16.mxu0 0
        %400 = vmatpush1.bf16.msra.mxu0 %v356
        %401 = vmatprep.subr.bf16.mxu0 0
        %402 = vmatpush1.bf16.msra.mxu0 %v355
        %403 = vmatprep.subr.bf16.mxu0 0
        %404 = vmatpush2.bf16.msra.mxu0 %v370
        %405 = vmatprep.subr.bf16.mxu0 0
        %406 = vmatpush2.bf16.msra.mxu0 %v369
        %407 = vmatprep.subr.bf16.mxu0 0
        %408 = vmatpush2.bf16.msra.mxu0 %v368
        %409 = vmatprep.subr.bf16.mxu0 0
        %410 = vmatpush2.bf16.msra.mxu0 %v367
        %411 = vmatprep.subr.bf16.mxu0 0
        %412 = vmatpush2.bf16.msra.mxu0 %v366
        %413 = vmatprep.subr.bf16.mxu0 0
        %414 = vmatpush2.bf16.msra.mxu0 %v365
        %415 = vmatprep.subr.bf16.mxu0 0
        %416 = vmatpush2.bf16.msra.mxu0 %v364
        %417 = vmatprep.subr.bf16.mxu0 0
        %418 = vmatpush2.bf16.msra.mxu0 %v363
        %419 = vmatprep.mubr.bf16.mxu0 %v288
        %420 = vmatmul.mubr.bf16.gmra.mxu0 %v287
        %v421 = vpop.f32.mrf.mxu0
        %v422 = vadd.f32 0.0, %v421
        %v423 = vpop.f32.mrf.mxu0
        %v424 = vpop.f32.mrf.mxu0
        %v425 = vpop.f32.mrf.mxu0
        %426 = vdwg.mxu0
        %v427 = vld [vmem:[%s2] sm:$0xf]
        %v428 = vpack.c.bf16 %v422, %v422
        %v429 = vld [vmem:[%s3] sm:$0xff]
        %vm430 = vcmask 64512
        %v432 = vsel %vm430, %v427, 0
        %vm434 = vcmask 1043456
        %v436 = vsel %vm434, %v428, 0
        %438 = vmatprep.subr.bf16.mxu0 0
        %439 = vmatpush1.bf16.msra.mxu0 0
        %440 = vmatprep.subr.bf16.mxu0 0
        %441 = vmatpush1.bf16.msra.mxu0 0
        %442 = vmatprep.subr.bf16.mxu0 0
        %443 = vmatpush1.bf16.msra.mxu0 0
        %444 = vmatprep.subr.bf16.mxu0 0
        %445 = vmatpush1.bf16.msra.mxu0 0
        %446 = vmatprep.subr.bf16.mxu0 0
        %447 = vmatpush1.bf16.msra.mxu0 0
        %448 = vmatprep.subr.bf16.mxu0 0
        %449 = vmatpush1.bf16.msra.mxu0 0
        %450 = vmatprep.subr.bf16.mxu0 0
        %451 = vmatpush1.bf16.msra.mxu0 0
        %452 = vmatprep.subr.bf16.mxu0 0
        %453 = vmatpush1.bf16.msra.mxu0 %v436
        %454 = vmatprep.subr.bf16.mxu0 0
        %455 = vmatpush2.bf16.msra.mxu0 0
        %456 = vmatprep.subr.bf16.mxu0 0
        %457 = vmatpush2.bf16.msra.mxu0 0
        %458 = vmatprep.subr.bf16.mxu0 0
        %459 = vmatpush2.bf16.msra.mxu0 0
        %460 = vmatprep.subr.bf16.mxu0 0
        %461 = vmatpush2.bf16.msra.mxu0 0
        %462 = vmatprep.subr.bf16.mxu0 0
        %463 = vmatpush2.bf16.msra.mxu0 0
        %464 = vmatprep.subr.bf16.mxu0 0
        %465 = vmatpush2.bf16.msra.mxu0 0
        %466 = vmatprep.subr.bf16.mxu0 0
        %467 = vmatpush2.bf16.msra.mxu0 0
        %468 = vmatprep.subr.bf16.mxu0 0
        %469 = vmatpush2.bf16.msra.mxu0 0
        %470 = vmatprep.mubr.bf16.mxu0 0
        %471 = vmatmul.mubr.bf16.gmra.mxu0 %v432
        %v472 = vpop.f32.mrf.mxu0
        %v473 = vadd.f32 %v429, %v472
        %v474 = vpop.f32.mrf.mxu0
        %v475 = vpop.f32.mrf.mxu0
        %v476 = vpop.f32.mrf.mxu0
        %477 = vdwg.mxu0
        %v478 = vmax.f32 %v473, 0.0
        %v479 = vld [vmem:[%s4] sm:$0xff]
        %v480 = vmul.f32 %v478, %v479
        %v481 = vpack.c.bf16 %v480, %v480
        %v482 = vld [vmem:[%s5] sm:$0xff]
        %v483 = vld [vmem:[%s5 + $0x8] sm:$0xff]
        %v484 = vld [vmem:[%s5 + $0x10] sm:$0xff]
        %v485 = vld [vmem:[%s5 + $0x18] sm:$0xff]
        %v486 = vld [vmem:[%s5 + $0x20] sm:$0xff]
        %v487 = vld [vmem:[%s5 + $0x28] sm:$0xff]
        %v488 = vld [vmem:[%s5 + $0x30] sm:$0x11]
        %v496 = vunpack.c.l.b16 %v482
        %v497 = vunpack.c.h.b16 %v482
        %v498 = vunpack.c.l.b16 %v483
        %v499 = vunpack.c.h.b16 %v483
        %v500 = vunpack.c.l.b16 %v484
        %v501 = vunpack.c.h.b16 %v484
        %v502 = vunpack.c.l.b16 %v485
        %v503 = vunpack.c.h.b16 %v485
        %v504 = vunpack.c.l.b16 %v486
        %v505 = vunpack.c.h.b16 %v486
        %v506 = vunpack.c.l.b16 %v487
        %v507 = vunpack.c.h.b16 %v487
        %v508 = vunpack.c.l.b16 %v488
        %v509 = vunpack.c.h.b16 %v488
        %v510 = vpack.c.b16 %v498, %v496
        %v511 = vpack.c.b16 %v499, %v497
        %v512 = vpack.c.b16 %v502, %v500
        %v513 = vpack.c.b16 %v503, %v501
        %v514 = vpack.c.b16 %v506, %v504
        %v515 = vpack.c.b16 %v507, %v505
        %v516 = vpack.c.b16 %v508, %v508
        %v517 = vpack.c.b16 %v509, %v509
        %vm524 = vcmask 408576
        %v526 = vsel %vm524, %v481, 0
        %vm528 = vcmask 1040384
        %v530 = vsel %vm528, %v516, 0
        %v533 = vsel %vm528, %v517, 0
        %535 = vmatprep.subr.bf16.mxu0 0
        %536 = vmatpush1.bf16.msra.mxu0 0
        %537 = vmatprep.subr.bf16.mxu0 0
        %538 = vmatpush1.bf16.msra.mxu0 0
        %539 = vmatprep.subr.bf16.mxu0 0
        %540 = vmatpush1.bf16.msra.mxu0 0
        %541 = vmatprep.subr.bf16.mxu0 0
        %542 = vmatpush1.bf16.msra.mxu0 0
        %543 = vmatprep.subr.bf16.mxu0 %v533
        %544 = vmatpush1.bf16.msra.mxu0 %v530
        %545 = vmatprep.subr.bf16.mxu0 %v515
        %546 = vmatpush1.bf16.msra.mxu0 %v514
        %547 = vmatprep.subr.bf16.mxu0 %v513
        %548 = vmatpush1.bf16.msra.mxu0 %v512
        %549 = vmatprep.subr.bf16.mxu0 %v511
        %550 = vmatpush1.bf16.msra.mxu0 %v510
        %551 = vmatprep.subr.bf16.mxu0 0
        %552 = vmatpush2.bf16.msra.mxu0 0
        %553 = vmatprep.subr.bf16.mxu0 0
        %554 = vmatpush2.bf16.msra.mxu0 0
        %555 = vmatprep.subr.bf16.mxu0 0
        %556 = vmatpush2.bf16.msra.mxu0 0
        %557 = vmatprep.subr.bf16.mxu0 0
        %558 = vmatpush2.bf16.msra.mxu0 0
        %559 = vmatprep.subr.bf16.mxu0 0
        %560 = vmatpush2.bf16.msra.mxu0 0
        %561 = vmatprep.subr.bf16.mxu0 0
        %562 = vmatpush2.bf16.msra.mxu0 0
        %563 = vmatprep.subr.bf16.mxu0 0
        %564 = vmatpush2.bf16.msra.mxu0 0
        %565 = vmatprep.subr.bf16.mxu0 0
        %566 = vmatpush2.bf16.msra.mxu0 0
        %567 = vmatprep.mubr.bf16.mxu0 0
        %568 = vmatmul.mubr.bf16.gmra.mxu0 %v526
        %v569 = vpop.f32.mrf.mxu0
        %v570 = vadd.f32 0.0, %v569
        %v571 = vpop.f32.mrf.mxu0
        %v572 = vadd.f32 0.0, %v571
        %v573 = vpop.f32.mrf.mxu0
        %v574 = vpop.f32.mrf.mxu0
        %575 = vdwg.mxu0
        %576 = vst [vmem:[%s244] sm:$0xff] %v570
        %577 = vst [vmem:[%s244 + $0x8] sm:$0xff] %v572
        %v578 = vunpack.c.l.bf16 %v251
        %v579 = vunpack.c.h.bf16 %v251
        %580 = vst [vmem:[%s244 + $0x10] sm:$0xff] %v578
        %581 = vst [vmem:[%s244 + $0x18] sm:$0xff] %v579
        %s582 = sand.u32 %s159, 1
        %s583 = scalar_lea.sflag [#allocation3], %s582
        %s584 = sand.u32 %s159, 1
        %s585 = smul.addr %s584, 32
        %s586 = scalar_lea.vmem [#allocation2], %s585
        // Predicated region
        $region45: #{tpu_custom_call.1} parent=43 // pred_check
          %p587 = pneg %p169
        $region46: #{tpu_custom_call.1} parent=43 // pred_check_branch
          %589 = sbr.rel (%p587) target = $region48
        $region47: #{tpu_custom_call.1} parent=43 // pred_region
          %s591 = ssub.s32 512, 512
          %592 = vsyncadd %s583, %s591
          %s593 = smul.addr %s20, 4
          %s594 = smul.addr %s593, 128
          %s595 = scalar_lea.hbm %s6, %s594
          %s596 = sshll.u32 %s586, 4
          %s597 = int_to_ptr.vmem [resolvable:$true] %s596
          %602 = dma.vmem_to_hbm [thread:$0]  %s597, 512, %s595, %s583, 256, 256, 16
        $region48: #{tpu_custom_call.1} parent=43 // pred_fallthru
          _
      $region44: #{tpu_custom_call.1} parent=5 // pred_fallthru
        _
      %p603 = scmp.le.s32.totalorder 2, %s15
      // Predicated region
      $region49: #{tpu_custom_call.1} parent=5 // pred_check
        %p604 = pneg %p603
      $region50: #{tpu_custom_call.1} parent=5 // pred_check_branch
        %606 = sbr.rel (%p604) target = $region52
      $region51: #{tpu_custom_call.1} parent=5 // pred_region
        %s607 = ssub.s32 %s15, 2
        // Predicated region
        $region53: #{tpu_custom_call.1} parent=51 // pred_check
          %p608 = pneg %p175
        $region54: #{tpu_custom_call.1} parent=51 // pred_check_branch
          %610 = sbr.rel (%p608) target = $region56
        $region55: #{tpu_custom_call.1} parent=51 // pred_region
          %s611 = sand.u32 %s160, 1
          %s612 = scalar_lea.sflag [#allocation3], %s611
          %s613 = sand.u32 %s160, 1
          %s614 = smul.addr %s613, 32
          %s615 = scalar_lea.vmem [#allocation2], %s614
          %616 = dma.done %s612, 512
        $region56: #{tpu_custom_call.1} parent=51 // pred_fallthru
          _
      $region52: #{tpu_custom_call.1} parent=5 // pred_fallthru
        _
    $region6: #{tpu_custom_call.1} parent=1 // loop_footer
      %s19 = sadd.s32 1, %s15
    $region7: #{tpu_custom_call.1} parent=1 // loop_footer_branch
      %14 = sbr.rel target = $region3
    $region8: #{tpu_custom_call.1} parent=1 // loop_exit
      _
    %617 = vsyncpa [#allocation3], 1
    %s618 = scalar_lea.sflag [#allocation3], 1
    %619 = vsyncpa %s618, 1

</llo_original>
